<compile_context>
chip_gen: v7x
topology: tpu7x:2x2x1
jax: 0.10.0
libtpu: 0.0.40
codegen_flags: <defaults>
</compile_context>

<pallas_src>
import math

import jax
import jax.numpy as jnp
from jax.experimental import pallas as pl
from jax.experimental.pallas import tpu as pltpu

# Module constants (deterministic, from __init__ defaults)
SCALE_INIT = 0.5413
SCALE_LB = 1e-5
AUX_WEIGHT = 1.0  # NOTE: log-fusion below relies on aux_weight == 1.0
SQRT2_PI = math.sqrt(2.0) * math.pi

LANES = 512            # lane-dense last dim (multiple of 128)
MAX_BLOCK_ROWS = 512   # (512, 512) f32 = 1 MiB per operand per buffer


def _cauchy_nll_kernel(x_ref, scale_ref, o_ref):
    x = x_ref[...]
    s = scale_ref[...]
    # softplus(s + scale_init) + scale_lb   (numerically stable softplus)
    sp = jax.nn.softplus(s + SCALE_INIT) + SCALE_LB
    # Exact reciprocal: approx=True risks missing the 1e-5 tolerance since the
    # error feeds the x*x term before the log.
    inv = pl.reciprocal(sp, approx=False)
    # aux_weight == 1.0 allows fusing the two logs:
    #   log(0.5*(x/sp)^2 + 1) + log(sqrt(2)*pi*sp)
    # = log(sqrt(2)*pi * (0.5*x*x/sp + sp))
    # -> one fewer EUP log per element.
    o_ref[...] = jnp.log(SQRT2_PI * (0.5 * (x * x) * inv + sp))


def cauchy_nll_2d_v2(x, scale):
    """x: [b, 1, h, w] float32; scale: any shape with b*h*w elements (viewed)."""
    b, c, h, w = x.shape
    assert c == 1, "CauchyNLL2Dv2 requires c == 1"
    # PyTorch: scale.view(bs_recs, 1, h, w)
    scale = scale.reshape(b, 1, h, w)

    # Elementwise op -> flatten to a lane-dense 2D slab (rows, LANES).
    total = b * h * w
    flat_x = x.reshape(-1)
    flat_s = scale.reshape(-1)

    rows = (total + LANES - 1) // LANES
    rows8 = ((rows + 7) // 8) * 8                 # sublane-tile multiple
    block_rows = min(MAX_BLOCK_ROWS, rows8)       # big blocks, but no giant fallback
    padded_rows = ((rows + block_rows - 1) // block_rows) * block_rows
    padded_total = padded_rows * LANES
    pad = padded_total - total
    if pad:
        # Zero padding is numerically safe: softplus(0 + scale_init) + lb > 0,
        # log stays finite; padded rows are sliced off below.
        flat_x = jnp.pad(flat_x, (0, pad))
        flat_s = jnp.pad(flat_s, (0, pad))

    x2 = flat_x.reshape(padded_rows, LANES)
    s2 = flat_s.reshape(padded_rows, LANES)
    grid = (padded_rows // block_rows,)

    cost = pl.CostEstimate(
        flops=8 * total,
        transcendentals=3 * total,        # exp + log1p (softplus) + fused log
        bytes_accessed=12 * total,        # 2 f32 inputs + 1 f32 output
    )

    out2 = pl.pallas_call(
        _cauchy_nll_kernel,
        out_shape=jax.ShapeDtypeStruct((padded_rows, LANES), x.dtype),
        grid_spec=pltpu.PrefetchScalarGridSpec(
            num_scalar_prefetch=0,
            grid=grid,
            in_specs=[
                pl.BlockSpec((block_rows, LANES), lambda i: (i, 0)),
                pl.BlockSpec((block_rows, LANES), lambda i: (i, 0)),
            ],
            out_specs=pl.BlockSpec((block_rows, LANES), lambda i: (i, 0)),
        ),
        compiler_params=pltpu.CompilerParams(
            dimension_semantics=("parallel",),   # elementwise: megacore-shardable
        ),
        cost_estimate=cost,
    )(x2, s2)

    return out2.reshape(-1)[:total].reshape(b, 1, h, w)


def _reference(x, scale):
    b, c, h, w = x.shape
    scale = scale.reshape(b, 1, h, w)
    sp = jax.nn.softplus(scale + SCALE_INIT) + SCALE_LB
    return jnp.log(0.5 * (x / sp) ** 2 + 1.0) + AUX_WEIGHT * jnp.log(SQRT2_PI * sp)


if __name__ == "__main__":
    key = jax.random.PRNGKey(0)
    kx, ks = jax.random.split(key)

    b, c, h, w = 2, 1, 16, 16
    x = jax.random.normal(kx, (b, c, h, w), dtype=jnp.float32)
    # predicted scale (pre-softplus), same number of elements as x
    scale = jax.random.normal(ks, (b, c, h, w), dtype=jnp.float32)

    out = cauchy_nll_2d_v2(x, scale)
    out = jax.block_until_ready(out)

    ref = _reference(x, scale)
    assert out.shape == (b, 1, h, w)
    assert jnp.allclose(out, ref, atol=1e-5, rtol=1e-5), "mismatch vs reference"

    print("KERNEL_OK")
</pallas_src>

<mosaic_0001>
module attributes {stable_mosaic.version = 11 : i64} {
  func.func @_cauchy_nll_kernel(%arg0: i32, %arg1: memref<8x512xf32, #tpu.memory_space<vmem>>, %arg2: memref<8x512xf32, #tpu.memory_space<vmem>>, %arg3: memref<8x512xf32, #tpu.memory_space<vmem>>) attributes {dimension_semantics = [#tpu.dimension_semantics<parallel>], iteration_bounds = array<i64: 1>, scalar_prefetch = 0 : i64, scratch_operands = 0 : i64, tpu.core_type = #tpu.core_type<tc>, window_params = [{transform_indices = @transform_0, window_bounds = array<i64: 8, 512>}, {transform_indices = @transform_1, window_bounds = array<i64: 8, 512>}, {transform_indices = @transform_2, window_bounds = array<i64: 8, 512>}]} {
    %c0 = arith.constant 0 : index
    %c0_0 = arith.constant 0 : index
    %0 = vector.load %arg1[%c0, %c0_0] : memref<8x512xf32, #tpu.memory_space<vmem>>, vector<8x512xf32>
    %c0_1 = arith.constant 0 : index
    %c0_2 = arith.constant 0 : index
    %1 = vector.load %arg2[%c0_1, %c0_2] : memref<8x512xf32, #tpu.memory_space<vmem>>, vector<8x512xf32>
    %cst = arith.constant 5.413000e-01 : f32
    %2 = vector.broadcast %cst : f32 to vector<8x512xf32>
    %3 = arith.addf %1, %2 : vector<8x512xf32>
    %cst_3 = arith.constant 0.000000e+00 : f32
    %4 = vector.broadcast %cst_3 : f32 to vector<8x512xf32>
    %5 = arith.maximumf %3, %4 : vector<8x512xf32>
    %6 = vector.broadcast %cst_3 : f32 to vector<8x512xf32>
    %7 = arith.subf %3, %6 : vector<8x512xf32>
    %8 = arith.cmpf one, %7, %7 : vector<8x512xf32>
    %9 = vector.broadcast %cst_3 : f32 to vector<8x512xf32>
    %10 = arith.addf %3, %9 : vector<8x512xf32>
    %11 = math.absf %7 : vector<8x512xf32>
    %cst_4 = arith.constant 0.000000e+00 : f32
    %12 = vector.broadcast %cst_4 : f32 to vector<8x512xf32>
    %13 = arith.subf %12, %11 : vector<8x512xf32>
    %14 = math.exp %13 : vector<8x512xf32>
    %15 = math.log1p %14 : vector<8x512xf32>
    %16 = arith.addf %5, %15 : vector<8x512xf32>
    %17 = arith.select %8, %10, %16 : vector<8x512xi1>, vector<8x512xf32>
    %cst_5 = arith.constant 9.99999974E-6 : f32
    %18 = vector.broadcast %cst_5 : f32 to vector<8x512xf32>
    %19 = arith.addf %17, %18 : vector<8x512xf32>
    %20 = tpu.reciprocal %19 : vector<8x512xf32> -> vector<8x512xf32>
    %21 = arith.mulf %0, %0 : vector<8x512xf32>
    %cst_6 = arith.constant 5.000000e-01 : f32
    %22 = vector.broadcast %cst_6 : f32 to vector<8x512xf32>
    %23 = arith.mulf %22, %21 : vector<8x512xf32>
    %24 = arith.mulf %23, %20 : vector<8x512xf32>
    %25 = arith.addf %24, %19 : vector<8x512xf32>
    %cst_7 = arith.constant 4.44288301 : f32
    %26 = vector.broadcast %cst_7 : f32 to vector<8x512xf32>
    %27 = arith.mulf %26, %25 : vector<8x512xf32>
    %28 = math.log %27 : vector<8x512xf32>
    %c0_8 = arith.constant 0 : index
    %c0_9 = arith.constant 0 : index
    %29 = vector.load %arg3[%c0_8, %c0_9] : memref<8x512xf32, #tpu.memory_space<vmem>>, vector<8x512xf32>
    tpu.vector_store %arg3[%c0_8, %c0_9], %28 {strides = array<i32>} : memref<8x512xf32, #tpu.memory_space<vmem>>, vector<8x512xf32>,
    return
  }
  func.func @transform_0(%arg0: i32) -> (i32, i32) {
    %c0_i32 = arith.constant 0 : i32
    %c0_i32_0 = arith.constant 0 : i32
    return %arg0, %c0_i32 : i32, i32
  }
  func.func @transform_1(%arg0: i32) -> (i32, i32) {
    %c0_i32 = arith.constant 0 : i32
    %c0_i32_0 = arith.constant 0 : i32
    return %arg0, %c0_i32 : i32, i32
  }
  func.func @transform_2(%arg0: i32) -> (i32, i32) {
    %c0_i32 = arith.constant 0 : i32
    %c0_i32_0 = arith.constant 0 : i32
    return %arg0, %c0_i32 : i32, i32
  }
}

</mosaic_0001>

<llo_original>
// kernel: tpu_custom_call.1
$region0: #{tpu_custom_call.1}
  #allocation0 [shape = 'u32[]', space=smem, size = 0x4, offset = 0x4, fixed_abs, tag = 'smem constant byte address 0x4 - core index']
  #allocation1 [shape = 'u32[144,128]{1,0:T(1,128)}', space=vmem, size = 0x12000, scoped, tag = 'internal scratch']
  %s0 = inlined_call_operand.hbm [shape: f32[8,512], index: 0, kind: input, shape index: {}]
  %s1 = inlined_call_operand.hbm [shape: f32[8,512], index: 1, kind: input, shape index: {}]
  %s2 = inlined_call_operand.hbm [shape: f32[8,512], index: 2, kind: output, shape index: {}]
  %s3 = sld [smem:[#allocation0]]
  $region26: #{tpu_custom_call.1} parent=0
    _
  %s5 = ssub.s32 1, %s3
  %s6 = scalar_select 0, %s5, %s3
  $region1: #{tpu_custom_call.1} parent=0
    #allocation2 [shape = 'u8[16384]{0}', space=vmem, size = 0x4000, scoped, tag = 'input window, operand 0, single buffered']
    #allocation3 [shape = 's32[1]{0}', space=sflag, size = 0x4, scoped, tag = 'scoped memory for tpu_custom_call.1']
    #allocation4 [shape = 's32[1]{0}', space=sflag, size = 0x4, scoped, tag = 'scoped memory for tpu_custom_call.1']
    #allocation5 [shape = 'u8[16384]{0}', space=vmem, size = 0x4000, scoped, tag = 'input window, operand 1, single buffered']
    #allocation6 [shape = 's32[1]{0}', space=sflag, size = 0x4, scoped, tag = 'scoped memory for tpu_custom_call.1']
    #allocation7 [shape = 'u8[16384]{0}', space=vmem, size = 0x4000, scoped, tag = 'output window, operand 0, single buffered']
    %7 = vsyncpa [#allocation3], 0
    %8 = vsyncpa [#allocation6], 0
    %9 = vsyncpa [#allocation4], 0
    // Predicated region
    $region2: #{tpu_custom_call.1} parent=1 // pred_check
      _
    $region3: #{tpu_custom_call.1} parent=1 // pred_check_branch
      %11 = sbr.rel (0) target = $region5
    $region4: #{tpu_custom_call.1} parent=1 // pred_region
      %s13 = ssub.s32 512, 512
      %14 = vsyncadd [#allocation3], %s13
      %s16 = sshll.u32 [#allocation2], 4
      %s17 = int_to_ptr.vmem [resolvable:$true] %s16
      %19 = dma.hbm_to_vmem [thread:$0]  %s0, 512, %s17, [#allocation3]
    $region5: #{tpu_custom_call.1} parent=1 // pred_fallthru
      _
    // Predicated region
    $region6: #{tpu_custom_call.1} parent=1 // pred_check
      _
    $region7: #{tpu_custom_call.1} parent=1 // pred_check_branch
      %21 = sbr.rel (0) target = $region9
    $region8: #{tpu_custom_call.1} parent=1 // pred_region
      %s23 = ssub.s32 512, 512
      %24 = vsyncadd [#allocation6], %s23
      %s26 = sshll.u32 [#allocation5], 4
      %s27 = int_to_ptr.vmem [resolvable:$true] %s26
      %29 = dma.hbm_to_vmem [thread:$0]  %s1, 512, %s27, [#allocation6]
    $region9: #{tpu_custom_call.1} parent=1 // pred_fallthru
      _
    // Predicated region
    $region10: #{tpu_custom_call.1} parent=1 // pred_check
      _
    $region11: #{tpu_custom_call.1} parent=1 // pred_check_branch
      %31 = sbr.rel (0) target = $region13
    $region12: #{tpu_custom_call.1} parent=1 // pred_region
      %32 = dma.done [#allocation3], 512
    $region13: #{tpu_custom_call.1} parent=1 // pred_fallthru
      _
    // Predicated region
    $region14: #{tpu_custom_call.1} parent=1 // pred_check
      _
    $region15: #{tpu_custom_call.1} parent=1 // pred_check_branch
      %34 = sbr.rel (0) target = $region17
    $region16: #{tpu_custom_call.1} parent=1 // pred_region
      %35 = dma.done [#allocation6], 512
    $region17: #{tpu_custom_call.1} parent=1 // pred_fallthru
      _
    %v36 = vld [vmem:[#allocation2] sm:$0xff]
    %v37 = vld [vmem:[#allocation2 + $0x8] sm:$0xff]
    %v38 = vld [vmem:[#allocation2 + $0x10] sm:$0xff]
    %v39 = vld [vmem:[#allocation2 + $0x18] sm:$0xff]
    %v40 = vld [vmem:[#allocation5] sm:$0xff]
    %v41 = vld [vmem:[#allocation5 + $0x8] sm:$0xff]
    %v42 = vld [vmem:[#allocation5 + $0x10] sm:$0xff]
    %v43 = vld [vmem:[#allocation5 + $0x18] sm:$0xff]
    %v44 = vadd.f32 %v40, 0.5413
    %v45 = vadd.f32 %v41, 0.5413
    %v46 = vadd.f32 %v42, 0.5413
    %v47 = vadd.f32 %v43, 0.5413
    %v48 = vmax.f32 %v44, 0.0
    %v49 = vmax.f32 %v45, 0.0
    %v50 = vmax.f32 %v46, 0.0
    %v51 = vmax.f32 %v47, 0.0
    %vm52 = vcmp.ne.f32.partialorder %v44, %v44
    %vm53 = vcmp.ne.f32.partialorder %v45, %v45
    %vm54 = vcmp.ne.f32.partialorder %v46, %v46
    %vm55 = vcmp.ne.f32.partialorder %v47, %v47
    %v56 = vadd.f32 %v44, 0.0
    %v57 = vadd.f32 %v45, 0.0
    %v58 = vadd.f32 %v46, 0.0
    %v59 = vadd.f32 %v47, 0.0
    %v60 = vand.u32 2147483647, %v44
    %v61 = vand.u32 2147483647, %v45
    %v62 = vand.u32 2147483647, %v46
    %v63 = vand.u32 2147483647, %v47
    %v64 = vsub.f32 0.0, %v60
    %v65 = vsub.f32 0.0, %v61
    %v66 = vsub.f32 0.0, %v62
    %v67 = vsub.f32 0.0, %v63
    %v68 = vmul.f32 %v64, 1.442695
    %v69 = vpow.pop %v68
    %v70 = vmul.f32 %v65, 1.442695
    %v71 = vpow.pop %v70
    %v72 = vmul.f32 %v66, 1.442695
    %v73 = vpow.pop %v72
    %v74 = vmul.f32 %v67, 1.442695
    %v75 = vpow.pop %v74
    %v76 = vadd.f32 %v69, 1.0
    %v77 = vlog2.pop %v76
    %v78 = vmul.f32 %v77, 0.6931472
    %v79 = vmul.f32 -0.5, %v69
    %v80 = vadd.f32 %v79, 1.0
    %v81 = vmul.f32 %v80, %v69
    %v82 = vand.u32 2147483647, %v69
    %vm83 = vcmp.lt.f32.partialorder %v82, 0.0004427343
    %v84 = vsel %vm83, %v81, %v78
    %v85 = vadd.f32 %v71, 1.0
    %v86 = vlog2.pop %v85
    %v87 = vmul.f32 %v86, 0.6931472
    %v88 = vmul.f32 -0.5, %v71
    %v89 = vadd.f32 %v88, 1.0
    %v90 = vmul.f32 %v89, %v71
    %v91 = vand.u32 2147483647, %v71
    %vm92 = vcmp.lt.f32.partialorder %v91, 0.0004427343
    %v93 = vsel %vm92, %v90, %v87
    %v94 = vadd.f32 %v73, 1.0
    %v95 = vlog2.pop %v94
    %v96 = vmul.f32 %v95, 0.6931472
    %v97 = vmul.f32 -0.5, %v73
    %v98 = vadd.f32 %v97, 1.0
    %v99 = vmul.f32 %v98, %v73
    %v100 = vand.u32 2147483647, %v73
    %vm101 = vcmp.lt.f32.partialorder %v100, 0.0004427343
    %v102 = vsel %vm101, %v99, %v96
    %v103 = vadd.f32 %v75, 1.0
    %v104 = vlog2.pop %v103
    %v105 = vmul.f32 %v104, 0.6931472
    %v106 = vmul.f32 -0.5, %v75
    %v107 = vadd.f32 %v106, 1.0
    %v108 = vmul.f32 %v107, %v75
    %v109 = vand.u32 2147483647, %v75
    %vm110 = vcmp.lt.f32.partialorder %v109, 0.0004427343
    %v111 = vsel %vm110, %v108, %v105
    %v112 = vadd.f32 %v48, %v84
    %v113 = vadd.f32 %v49, %v93
    %v114 = vadd.f32 %v50, %v102
    %v115 = vadd.f32 %v51, %v111
    %v116 = vsel %vm52, %v56, %v112
    %v117 = vsel %vm53, %v57, %v113
    %v118 = vsel %vm54, %v58, %v114
    %v119 = vsel %vm55, %v59, %v115
    %v120 = vadd.f32 %v116, 1e-05
    %v121 = vadd.f32 %v117, 1e-05
    %v122 = vadd.f32 %v118, 1e-05
    %v123 = vadd.f32 %v119, 1e-05
    %v124 = vrcp.pop %v120
    %v125 = vrcp.pop %v121
    %v126 = vrcp.pop %v122
    %v127 = vrcp.pop %v123
    %v128 = vmul.f32 %v36, %v36
    %v129 = vmul.f32 %v37, %v37
    %v130 = vmul.f32 %v38, %v38
    %v131 = vmul.f32 %v39, %v39
    %v132 = vmul.f32 %v128, 0.5
    %v133 = vmul.f32 %v129, 0.5
    %v134 = vmul.f32 %v130, 0.5
    %v135 = vmul.f32 %v131, 0.5
    %v136 = vmul.f32 %v132, %v124
    %v137 = vmul.f32 %v133, %v125
    %v138 = vmul.f32 %v134, %v126
    %v139 = vmul.f32 %v135, %v127
    %v140 = vadd.f32 %v136, %v120
    %v141 = vadd.f32 %v137, %v121
    %v142 = vadd.f32 %v138, %v122
    %v143 = vadd.f32 %v139, %v123
    %v144 = vmul.f32 %v140, 4.442883
    %v145 = vmul.f32 %v141, 4.442883
    %v146 = vmul.f32 %v142, 4.442883
    %v147 = vmul.f32 %v143, 4.442883
    %v148 = vlog2.pop %v144
    %v149 = vmul.f32 %v148, 0.6931472
    %v150 = vlog2.pop %v145
    %v151 = vmul.f32 %v150, 0.6931472
    %v152 = vlog2.pop %v146
    %v153 = vmul.f32 %v152, 0.6931472
    %v154 = vlog2.pop %v147
    %v155 = vmul.f32 %v154, 0.6931472
    %156 = vst [vmem:[#allocation7] sm:$0xff] %v149
    %157 = vst [vmem:[#allocation7 + $0x8] sm:$0xff] %v151
    %158 = vst [vmem:[#allocation7 + $0x10] sm:$0xff] %v153
    %159 = vst [vmem:[#allocation7 + $0x18] sm:$0xff] %v155
    // Predicated region
    $region18: #{tpu_custom_call.1} parent=1 // pred_check
      _
    $region19: #{tpu_custom_call.1} parent=1 // pred_check_branch
      %161 = sbr.rel (0) target = $region21
    $region20: #{tpu_custom_call.1} parent=1 // pred_region
      %s163 = ssub.s32 512, 512
      %164 = vsyncadd [#allocation4], %s163
      %s166 = sshll.u32 [#allocation7], 4
      %s167 = int_to_ptr.vmem [resolvable:$true] %s166
      %169 = dma.vmem_to_hbm [thread:$0]  %s167, 512, %s2, [#allocation4]
    $region21: #{tpu_custom_call.1} parent=1 // pred_fallthru
      _
    // Predicated region
    $region22: #{tpu_custom_call.1} parent=1 // pred_check
      _
    $region23: #{tpu_custom_call.1} parent=1 // pred_check_branch
      %171 = sbr.rel (0) target = $region25
    $region24: #{tpu_custom_call.1} parent=1 // pred_region
      %172 = dma.done [#allocation4], 512
    $region25: #{tpu_custom_call.1} parent=1 // pred_fallthru
      _
    %173 = vsyncpa [#allocation3], 1
    %174 = vsyncpa [#allocation6], 1
    %175 = vsyncpa [#allocation4], 1

</llo_original>
